<compile_context>
chip_gen: v5e
topology: v5e:2x2
jax: 0.10.0
libtpu: 0.0.40
codegen_flags: <defaults>
</compile_context>

<pallas_src>
import math

import jax
import jax.numpy as jnp
from jax.experimental import pallas as pl
from jax.experimental.pallas import tpu as pltpu


def _round_up(x, m):
    return ((x + m - 1) // m) * m


# --------------------------------------------------------------- kernels ----

def _linear_kernel(x_ref, wt_ref, b_ref, o_ref, acc_ref):
    """One (tm, tn) output tile, accumulated over the K grid axis.

    x_ref  : (tm, tk)  activation tile
    wt_ref : (tk, tn)  pre-transposed weight tile (lane-dense, no RHS transpose)
    b_ref  : (1, tn)   bias tile
    o_ref  : (tm, tn)  output tile
    acc_ref: (tm, tn)  f32 VMEM accumulator (persists across the K axis)
    """
    k = pl.program_id(2)

    @pl.when(k == 0)
    def _():
        acc_ref[...] = jnp.zeros_like(acc_ref)

    acc_ref[...] += jnp.dot(x_ref[...], wt_ref[...],
                            preferred_element_type=jnp.float32)

    @pl.when(k == pl.num_programs(2) - 1)
    def _():
        o_ref[...] = (acc_ref[...] + b_ref[...].astype(jnp.float32)
                      ).astype(o_ref.dtype)


def _linear_sample_kernel(x_ref, wt_ref, eps_ref, rho_ref, b_ref, o_ref, acc_ref):
    """Sampled-weight path fused into the matmul:
        w' = mu + 0.1 * softplus(rho) * eps
    built per (tk, tn) tile in VMEM; never written to / re-read from HBM.
    softplus/exp go to the EUP slot, mul/add to the VALU, both hidden under
    the MXU work.
    """
    k = pl.program_id(2)

    @pl.when(k == 0)
    def _():
        acc_ref[...] = jnp.zeros_like(acc_ref)

    sigma = jnp.log1p(jnp.exp(rho_ref[...].astype(jnp.float32)))   # (1, tn)
    w = (wt_ref[...].astype(jnp.float32)
         + 0.1 * sigma * eps_ref[...].astype(jnp.float32))
    acc_ref[...] += jnp.dot(x_ref[...], w.astype(wt_ref.dtype),
                            preferred_element_type=jnp.float32)

    @pl.when(k == pl.num_programs(2) - 1)
    def _():
        o_ref[...] = (acc_ref[...] + b_ref[...].astype(jnp.float32)
                      ).astype(o_ref.dtype)


# ---------------------------------------------------------------- wrapper ----

def _tiled_linear(x, w_t, bias, *, eps_t=None, rho_t=None,
                  tm=None, tn=None, tk=None, out_dtype=None):
    """y = x @ w_t + bias   (w_t is the (IN, OUT) pre-transposed weight).

    If eps_t / rho_t are given, the kernel computes
      y = x @ (w_t + 0.1 * softplus(rho_t) * eps_t) + bias
    with the perturbation fused per-tile in VMEM.
    """
    B, IN = x.shape
    IN_w, OUT = w_t.shape
    assert IN == IN_w, (IN, IN_w)
    out_dtype = out_dtype or x.dtype

    # Tile sizes: sublane-aligned M, lane-dense (multiples of 128) N and K.
    tm = tm or min(256, _round_up(B, 8))
    tn = tn or min(256, _round_up(OUT, 128))
    tk = tk or min(512, _round_up(IN, 128))

    Bp, INp, OUTp = _round_up(B, tm), _round_up(IN, tk), _round_up(OUT, tn)

    # Zero-pad up to tile multiples (zeros contribute nothing to the matmul;
    # padded output columns are sliced off at the end).
    if (Bp, INp) != (B, IN):
        x = jnp.pad(x, ((0, Bp - B), (0, INp - IN)))
    if (INp, OUTp) != (IN, OUT):
        w_t = jnp.pad(w_t, ((0, INp - IN), (0, OUTp - OUT)))
        if eps_t is not None:
            eps_t = jnp.pad(eps_t, ((0, INp - IN), (0, OUTp - OUT)))
    bias2d = bias.reshape(1, OUT)
    if OUTp != OUT:
        bias2d = jnp.pad(bias2d, ((0, 0), (0, OUTp - OUT)))
        if rho_t is not None:
            rho_t = jnp.pad(rho_t, ((0, 0), (0, OUTp - OUT)))

    grid = (Bp // tm, OUTp // tn, INp // tk)

    x_spec = pl.BlockSpec((tm, tk), lambda i, j, k: (i, k))
    w_spec = pl.BlockSpec((tk, tn), lambda i, j, k: (k, j))
    b_spec = pl.BlockSpec((1, tn), lambda i, j, k: (0, j))
    o_spec = pl.BlockSpec((tm, tn), lambda i, j, k: (i, j))

    if eps_t is None:
        kernel = _linear_kernel
        in_specs = [x_spec, w_spec, b_spec]
        operands = (x, w_t, bias2d)
        transcendentals = 0
    else:
        kernel = _linear_sample_kernel
        eps_spec = pl.BlockSpec((tk, tn), lambda i, j, k: (k, j))
        rho_spec = pl.BlockSpec((1, tn), lambda i, j, k: (0, j))
        in_specs = [x_spec, w_spec, eps_spec, rho_spec, b_spec]
        operands = (x, w_t, eps_t, rho_t, bias2d)
        transcendentals = 2 * OUTp * grid[0] * grid[2]   # exp + log1p per rho row

    bytes_accessed = sum(int(a.size) * a.dtype.itemsize for a in operands)
    bytes_accessed += Bp * OUTp * jnp.dtype(out_dtype).itemsize

    out = pl.pallas_call(
        kernel,
        out_shape=jax.ShapeDtypeStruct((Bp, OUTp), out_dtype),
        grid_spec=pltpu.PrefetchScalarGridSpec(
            num_scalar_prefetch=0,
            grid=grid,
            in_specs=in_specs,
            out_specs=o_spec,
            scratch_shapes=[pltpu.VMEM((tm, tn), jnp.float32)],
        ),
        compiler_params=pltpu.CompilerParams(
            dimension_semantics=("parallel", "parallel", "arbitrary"),
        ),
        cost_estimate=pl.CostEstimate(
            flops=2 * Bp * INp * OUTp,
            transcendentals=transcendentals,
            bytes_accessed=bytes_accessed,
        ),
    )(*operands)

    if (Bp, OUTp) != (B, OUT):
        out = out[:B, :OUT]
    return out


def sharable_linear(x, params, *, sample=False, key=None, compute_dtype=None):
    """Mirrors SharableLinear.forward (F.linear with optionally sampled weight).

    compute_dtype: optionally cast x / weight / eps (e.g. jnp.bfloat16) for the
    MXU; accumulation stays f32 inside the kernel.
    """
    w_t = params["weight_t"]              # (IN, OUT), stored pre-transposed
    bias = params["bias"]                 # (OUT,)
    if compute_dtype is not None:
        x = x.astype(compute_dtype)
        w_t = w_t.astype(compute_dtype)
    if sample:
        if key is None:
            raise ValueError("sample=True requires a PRNG key")
        rho_t = params["weight_rho"].reshape(1, -1)            # (1, OUT)
        eps_t = jax.random.normal(key, w_t.shape, w_t.dtype)   # (IN, OUT)
        # TODO(synk): generate eps in-kernel via pltpu.prng_seed/prng_random_bits
        # to also drop the eps HBM read (currently fused mu+eps read only).
        return _tiled_linear(x, w_t, bias, eps_t=eps_t, rho_t=rho_t,
                             out_dtype=x.dtype)
    return _tiled_linear(x, w_t, bias, out_dtype=x.dtype)


def init_sharable_linear(key, in_features, out_features, ratio=0.5,
                         dtype=jnp.float32):
    """Same parameterization as SharableLinear.__init__, weight stored (IN, OUT)."""
    weight = 0.01 * jax.random.normal(key, (out_features, in_features), dtype)
    bias = jnp.zeros((out_features,), dtype)
    fan_in = in_features
    total_var = 2.0 / fan_in
    noise_var = total_var * ratio
    noise_std = math.sqrt(noise_var)
    rho_init = math.log(math.exp(noise_std) - 1.0)
    weight_rho = jnp.full((out_features, 1), rho_init, dtype)
    # Store the weight pre-transposed: lane-dense RHS tiles, no MXU transpose.
    return {"weight_t": weight.T, "bias": bias, "weight_rho": weight_rho}


if __name__ == "__main__":
    key = jax.random.PRNGKey(0)
    k_param, k_x, k_eps = jax.random.split(key, 3)

    # small demo shapes consistent with the module
    B, IN, OUT = 8, 32, 64
    params = init_sharable_linear(k_param, IN, OUT, ratio=0.5)
    x = jax.random.normal(k_x, (B, IN), jnp.float32)

    # deterministic path (sample=False)
    y = jax.block_until_ready(sharable_linear(x, params, sample=False))

    # sampled-weight path (sample=True), fused perturbation
    y_s = jax.block_until_ready(sharable_linear(x, params, sample=True, key=k_eps))

    # plain-JAX references
    w = params["weight_t"].T                               # (OUT, IN), torch layout
    y_ref = x @ w.T + params["bias"]
    sigma = jnp.log1p(jnp.exp(params["weight_rho"]))       # (OUT, 1)
    eps_t = jax.random.normal(k_eps, params["weight_t"].shape, jnp.float32)
    w_s = w + 0.1 * sigma * eps_t.T                        # same eps as the kernel path
    y_s_ref = x @ w_s.T + params["bias"]

    assert y.shape == (B, OUT) and y_s.shape == (B, OUT)
    assert jnp.allclose(y, y_ref, atol=1e-5, rtol=1e-5)
    assert jnp.allclose(y_s, y_s_ref, atol=1e-4, rtol=1e-4)

    # larger, non-aligned shape exercising the full (M, N, K) grid + accumulator
    B2, IN2, OUT2 = 256, 640, 384
    params2 = init_sharable_linear(jax.random.PRNGKey(1), IN2, OUT2)
    x2 = jax.random.normal(jax.random.PRNGKey(2), (B2, IN2), jnp.float32)
    y2 = jax.block_until_ready(sharable_linear(x2, params2))
    y2_ref = jnp.dot(x2, params2["weight_t"],
                     precision=jax.lax.Precision.HIGHEST) + params2["bias"]
    assert y2.shape == (B2, OUT2)
    assert jnp.allclose(y2, y2_ref, atol=2e-3, rtol=2e-3)

    print("KERNEL_OK")
</pallas_src>

<mosaic_0001>
module attributes {stable_mosaic.version = 11 : i64} {
  func.func @_linear_kernel(%arg0: i32, %arg1: i32, %arg2: i32, %arg3: memref<8x128xf32, #tpu.memory_space<vmem>>, %arg4: memref<128x128xf32, #tpu.memory_space<vmem>>, %arg5: memref<1x128xf32, #tpu.memory_space<vmem>>, %arg6: memref<8x128xf32, #tpu.memory_space<vmem>>, %arg7: memref<8x128xf32, #tpu.memory_space<vmem>>) attributes {dimension_semantics = [#tpu.dimension_semantics<parallel>, #tpu.dimension_semantics<parallel>, #tpu.dimension_semantics<arbitrary>], iteration_bounds = array<i64: 1, 1, 1>, scalar_prefetch = 0 : i64, scratch_operands = 1 : i64, tpu.core_type = #tpu.core_type<tc>, window_params = [{transform_indices = @transform_0, window_bounds = array<i64: 8, 128>}, {transform_indices = @transform_1, window_bounds = array<i64: 128, 128>}, {transform_indices = @transform_2, window_bounds = array<i64: 1, 128>}, {transform_indices = @transform_3, window_bounds = array<i64: 8, 128>}]} {
    %c0_i32 = arith.constant 0 : i32
    %0 = arith.cmpi eq, %arg2, %c0_i32 : i32
    %1 = arith.extui %0 : i1 to i32
    %c0_i32_0 = arith.constant 0 : i32
    %2 = arith.cmpi ne, %1, %c0_i32_0 : i32
    scf.if %2 {
      %cst_10 = arith.constant 0.000000e+00 : f32
      %12 = vector.broadcast %cst_10 : f32 to vector<8x128xf32>
      %c0_11 = arith.constant 0 : index
      %c0_12 = arith.constant 0 : index
      %13 = vector.load %arg7[%c0_11, %c0_12] : memref<8x128xf32, #tpu.memory_space<vmem>>, vector<8x128xf32>
      tpu.vector_store %arg7[%c0_11, %c0_12], %12 {strides = array<i32>} : memref<8x128xf32, #tpu.memory_space<vmem>>, vector<8x128xf32>,
    } else {
    }
    %c0 = arith.constant 0 : index
    %c0_1 = arith.constant 0 : index
    %3 = vector.load %arg7[%c0, %c0_1] : memref<8x128xf32, #tpu.memory_space<vmem>>, vector<8x128xf32>
    %c0_2 = arith.constant 0 : index
    %c0_3 = arith.constant 0 : index
    %4 = vector.load %arg3[%c0_2, %c0_3] : memref<8x128xf32, #tpu.memory_space<vmem>>, vector<8x128xf32>
    %c0_4 = arith.constant 0 : index
    %c0_5 = arith.constant 0 : index
    %5 = vector.load %arg4[%c0_4, %c0_5] : memref<128x128xf32, #tpu.memory_space<vmem>>, vector<128x128xf32>
    %cst = arith.constant dense<0.000000e+00> : vector<8x128xf32>
    %6 = tpu.matmul %4, %5, %cst {dimension_numbers = #tpu.dot_dimension_numbers<[1], [0], [0], [1], [0, 0, 1, 1], [], []>} : vector<8x128xf32>, vector<128x128xf32>, vector<8x128xf32> -> vector<8x128xf32>
    %7 = arith.addf %3, %6 : vector<8x128xf32>
    %c0_6 = arith.constant 0 : index
    %c0_7 = arith.constant 0 : index
    %8 = vector.load %arg7[%c0_6, %c0_7] : memref<8x128xf32, #tpu.memory_space<vmem>>, vector<8x128xf32>
    tpu.vector_store %arg7[%c0_6, %c0_7], %7 {strides = array<i32>} : memref<8x128xf32, #tpu.memory_space<vmem>>, vector<8x128xf32>,
    %c0_i32_8 = arith.constant 0 : i32
    %9 = arith.cmpi eq, %arg2, %c0_i32_8 : i32
    %10 = arith.extui %9 : i1 to i32
    %c0_i32_9 = arith.constant 0 : i32
    %11 = arith.cmpi ne, %10, %c0_i32_9 : i32
    scf.if %11 {
      %c0_10 = arith.constant 0 : index
      %c0_11 = arith.constant 0 : index
      %12 = vector.load %arg7[%c0_10, %c0_11] : memref<8x128xf32, #tpu.memory_space<vmem>>, vector<8x128xf32>
      %c0_12 = arith.constant 0 : index
      %c0_13 = arith.constant 0 : index
      %13 = vector.load %arg5[%c0_12, %c0_13] : memref<1x128xf32, #tpu.memory_space<vmem>>, vector<1x128xf32>
      %14 = vector.broadcast %13 : vector<1x128xf32> to vector<8x128xf32>
      %15 = arith.addf %12, %14 : vector<8x128xf32>
      %c0_14 = arith.constant 0 : index
      %c0_15 = arith.constant 0 : index
      %16 = vector.load %arg6[%c0_14, %c0_15] : memref<8x128xf32, #tpu.memory_space<vmem>>, vector<8x128xf32>
      tpu.vector_store %arg6[%c0_14, %c0_15], %15 {strides = array<i32>} : memref<8x128xf32, #tpu.memory_space<vmem>>, vector<8x128xf32>,
    } else {
    }
    return
  }
  func.func @transform_0(%arg0: i32, %arg1: i32, %arg2: i32) -> (i32, i32) {
    %c0_i32 = arith.constant 0 : i32
    return %arg0, %arg2 : i32, i32
  }
  func.func @transform_1(%arg0: i32, %arg1: i32, %arg2: i32) -> (i32, i32) {
    %c0_i32 = arith.constant 0 : i32
    return %arg2, %arg1 : i32, i32
  }
  func.func @transform_2(%arg0: i32, %arg1: i32, %arg2: i32) -> (i32, i32) {
    %c0_i32 = arith.constant 0 : i32
    %c0_i32_0 = arith.constant 0 : i32
    return %c0_i32, %arg1 : i32, i32
  }
  func.func @transform_3(%arg0: i32, %arg1: i32, %arg2: i32) -> (i32, i32) {
    %c0_i32 = arith.constant 0 : i32
    return %arg0, %arg1 : i32, i32
  }
}

</mosaic_0001>

<llo_original>
// kernel: tpu_custom_call.1
$region0: #{tpu_custom_call.1}
  #allocation0 [shape = 'u32[]', space=smem, size = 0x4, offset = 0x4, fixed_abs, tag = 'smem constant byte address 0x4 - core index']
  #allocation1 [shape = 'u32[72,128]{1,0:T(1,128)}', space=vmem, size = 0x9000, scoped, tag = 'internal scratch']
  #allocation2 [shape = 'f32[8,128]{1,0:T(8,128)}', space=vmem, size = 0x1000, scoped, tag = 'scratch operand']
  %s0 = inlined_call_operand.hbm [shape: f32[8,128], index: 0, kind: input, shape index: {}]
  %s1 = inlined_call_operand.hbm [shape: f32[128,128], index: 1, kind: input, shape index: {}]
  %s2 = inlined_call_operand.vmem [shape: f32[1,128], index: 2, kind: input, shape index: {}]
  %s3 = inlined_call_operand.hbm [shape: f32[8,128], index: 3, kind: output, shape index: {}]
  %s4 = sld [smem:[#allocation0]]
  $region38: #{tpu_custom_call.1} parent=0
    _
  %s6 = ssub.s32 1, %s4
  %s7 = scalar_select 0, %s6, %s4
  $region1: #{tpu_custom_call.1} parent=0
    #allocation3 [shape = 'u8[4096]{0}', space=vmem, size = 0x1000, scoped, tag = 'input window, operand 0, single buffered']
    #allocation4 [shape = 's32[1]{0}', space=sflag, size = 0x4, scoped, tag = 'scoped memory for tpu_custom_call.1']
    #allocation5 [shape = 's32[1]{0}', space=sflag, size = 0x4, scoped, tag = 'scoped memory for tpu_custom_call.1']
    #allocation6 [shape = 'u8[65536]{0}', space=vmem, size = 0x10000, scoped, tag = 'input window, operand 1, single buffered']
    #allocation7 [shape = 's32[1]{0}', space=sflag, size = 0x4, scoped, tag = 'scoped memory for tpu_custom_call.1']
    #allocation8 [shape = 'u8[4096]{0}', space=vmem, size = 0x1000, scoped, tag = 'output window, operand 0, single buffered']
    %8 = vsyncpa [#allocation4], 0
    %9 = vsyncpa [#allocation7], 0
    %10 = vsyncpa [#allocation5], 0
    // Predicated region
    $region2: #{tpu_custom_call.1} parent=1 // pred_check
      _
    $region3: #{tpu_custom_call.1} parent=1 // pred_check_branch
      %12 = sbr.rel (0) target = $region5
    $region4: #{tpu_custom_call.1} parent=1 // pred_region
      %14 = vsyncadd [#allocation4], 0
      %s16 = sshll.u32 %s0, 4
      %s17 = int_to_ptr.hbm [resolvable:$true] %s16
      %s18 = sshll.u32 [#allocation3], 4
      %s19 = int_to_ptr.vmem [resolvable:$true] %s18
      %21 = dma.hbm_to_vmem [thread:$0]  %s17, 128, %s19, [#allocation4]
    $region5: #{tpu_custom_call.1} parent=1 // pred_fallthru
      _
    // Predicated region
    $region6: #{tpu_custom_call.1} parent=1 // pred_check
      _
    $region7: #{tpu_custom_call.1} parent=1 // pred_check_branch
      %23 = sbr.rel (0) target = $region9
    $region8: #{tpu_custom_call.1} parent=1 // pred_region
      %25 = vsyncadd [#allocation7], 0
      %s26 = sshll.u32 %s1, 4
      %s27 = int_to_ptr.hbm [resolvable:$true] %s26
      %s28 = sshll.u32 [#allocation6], 4
      %s29 = int_to_ptr.vmem [resolvable:$true] %s28
      %34 = dma.hbm_to_vmem [thread:$0]  %s27, 2048, %s29, [#allocation7], 128, 128, 8
    $region9: #{tpu_custom_call.1} parent=1 // pred_fallthru
      _
    // Predicated region
    $region10: #{tpu_custom_call.1} parent=1 // pred_check
      _
    $region11: #{tpu_custom_call.1} parent=1 // pred_check_branch
      %36 = sbr.rel (0) target = $region13
    $region12: #{tpu_custom_call.1} parent=1 // pred_region
      _
    $region13: #{tpu_custom_call.1} parent=1 // pred_fallthru
      _
    // Predicated region
    $region14: #{tpu_custom_call.1} parent=1 // pred_check
      _
    $region15: #{tpu_custom_call.1} parent=1 // pred_check_branch
      %38 = sbr.rel (0) target = $region17
    $region16: #{tpu_custom_call.1} parent=1 // pred_region
      %40 = dma.done [#allocation4], 128
    $region17: #{tpu_custom_call.1} parent=1 // pred_fallthru
      _
    // Predicated region
    $region18: #{tpu_custom_call.1} parent=1 // pred_check
      _
    $region19: #{tpu_custom_call.1} parent=1 // pred_check_branch
      %42 = sbr.rel (0) target = $region21
    $region20: #{tpu_custom_call.1} parent=1 // pred_region
      %44 = dma.done [#allocation7], 2048
    $region21: #{tpu_custom_call.1} parent=1 // pred_fallthru
      _
    %p45 = scmp.eq.s32.totalorder 0, 0
    // Predicated region
    $region22: #{tpu_custom_call.1} parent=1 // pred_check
      %p46 = pneg %p45
    $region23: #{tpu_custom_call.1} parent=1 // pred_check_branch
      %48 = sbr.rel (%p46) target = $region25
    $region24: #{tpu_custom_call.1} parent=1 // pred_region
      %49 = vst [vmem:[#allocation2] sm:$0xff] 0.0
    $region25: #{tpu_custom_call.1} parent=1 // pred_fallthru
      _
    %v50 = vld [vmem:[#allocation2] sm:$0xff]
    %v51 = vld [vmem:[#allocation3] sm:$0xff]
    %v52 = vld [vmem:[#allocation6] sm:$0xff]
    %v53 = vld [vmem:[#allocation6 + $0x8] sm:$0xff]
    %v54 = vld [vmem:[#allocation6 + $0x10] sm:$0xff]
    %v55 = vld [vmem:[#allocation6 + $0x18] sm:$0xff]
    %v56 = vld [vmem:[#allocation6 + $0x20] sm:$0xff]
    %v57 = vld [vmem:[#allocation6 + $0x28] sm:$0xff]
    %v58 = vld [vmem:[#allocation6 + $0x30] sm:$0xff]
    %v59 = vld [vmem:[#allocation6 + $0x38] sm:$0xff]
    %v60 = vld [vmem:[#allocation6 + $0x40] sm:$0xff]
    %v61 = vld [vmem:[#allocation6 + $0x48] sm:$0xff]
    %v62 = vld [vmem:[#allocation6 + $0x50] sm:$0xff]
    %v63 = vld [vmem:[#allocation6 + $0x58] sm:$0xff]
    %v64 = vld [vmem:[#allocation6 + $0x60] sm:$0xff]
    %v65 = vld [vmem:[#allocation6 + $0x68] sm:$0xff]
    %v66 = vld [vmem:[#allocation6 + $0x70] sm:$0xff]
    %v67 = vld [vmem:[#allocation6 + $0x78] sm:$0xff]
    %68 = vmatpush.msra.mxu0 %v67
    %69 = vmatpush.msra.mxu0 %v66
    %70 = vmatpush.msra.mxu0 %v65
    %71 = vmatpush.msra.mxu0 %v64
    %72 = vmatpush.msra.mxu0 %v63
    %73 = vmatpush.msra.mxu0 %v62
    %74 = vmatpush.msra.mxu0 %v61
    %75 = vmatpush.msra.mxu0 %v60
    %76 = vmatpush.msra.mxu0 %v59
    %77 = vmatpush.msra.mxu0 %v58
    %78 = vmatpush.msra.mxu0 %v57
    %79 = vmatpush.msra.mxu0 %v56
    %80 = vmatpush.msra.mxu0 %v55
    %81 = vmatpush.msra.mxu0 %v54
    %82 = vmatpush.msra.mxu0 %v53
    %83 = vmatpush.msra.mxu0 %v52
    %84 = vmatmul.f32.gmra.mxu0 %v51
    %v85 = vpop.f32.mrf.mxu0
    %v86 = vadd.f32 0.0, %v85
    %87 = vdwg.mxu0
    %v88 = vadd.f32 %v50, %v86
    %89 = vst [vmem:[#allocation2] sm:$0xff] %v88
    // Predicated region
    $region26: #{tpu_custom_call.1} parent=1 // pred_check
      %p90 = pneg %p45
    $region27: #{tpu_custom_call.1} parent=1 // pred_check_branch
      %92 = sbr.rel (%p90) target = $region29
    $region28: #{tpu_custom_call.1} parent=1 // pred_region
      %v93 = vld [vmem:[#allocation2] sm:$0xff]
      %v94 = vld [vmem:[%s2] sm:$0x1]
      %v96 = vperm.slane %v94, 0
      %v98 = vadd.f32 %v93, %v96
      %99 = vst [vmem:[#allocation8] sm:$0xff] %v98
    $region29: #{tpu_custom_call.1} parent=1 // pred_fallthru
      _
    // Predicated region
    $region30: #{tpu_custom_call.1} parent=1 // pred_check
      _
    $region31: #{tpu_custom_call.1} parent=1 // pred_check_branch
      %101 = sbr.rel (0) target = $region33
    $region32: #{tpu_custom_call.1} parent=1 // pred_region
      %103 = vsyncadd [#allocation5], 0
      %s105 = sshll.u32 [#allocation8], 4
      %s106 = int_to_ptr.vmem [resolvable:$true] %s105
      %s107 = sshll.u32 %s3, 4
      %s108 = int_to_ptr.hbm [resolvable:$true] %s107
      %110 = dma.vmem_to_hbm [thread:$0]  %s106, 128, %s108, [#allocation5]
    $region33: #{tpu_custom_call.1} parent=1 // pred_fallthru
      _
    // Predicated region
    $region34: #{tpu_custom_call.1} parent=1 // pred_check
      _
    $region35: #{tpu_custom_call.1} parent=1 // pred_check_branch
      %112 = sbr.rel (0) target = $region37
    $region36: #{tpu_custom_call.1} parent=1 // pred_region
      %114 = dma.done [#allocation5], 128
    $region37: #{tpu_custom_call.1} parent=1 // pred_fallthru
      _
    %115 = vsyncpa [#allocation4], 1
    %116 = vsyncpa [#allocation7], 1
    %117 = vsyncpa [#allocation5], 1

</llo_original>
